<compile_context>
chip_gen: v7x
topology: tpu7x:2x2x1
jax: 0.10.0
libtpu: 0.0.40
codegen_flags: <defaults>
</compile_context>

<pallas_src>
import jax
import jax.numpy as jnp
from jax import lax
from jax.experimental import pallas as pl
from jax.experimental.pallas import tpu as pltpu


def _make_head_kernel(seq_len, tile_s):
    """Builds the kernel closure (seq_len / tile_s are trace-time constants)."""
    ragged = (seq_len % tile_s) != 0
    inv_s = 1.0 / float(seq_len)

    def kernel(x_ref, w1_ref, b1_ref, w2_ref, b2_ref, w3_ref, b3_ref,
               o_ref, acc_ref):
        s = pl.program_id(1)
        ns = pl.num_programs(1)

        @pl.when(s == 0)
        def _init():
            acc_ref[...] = jnp.zeros_like(acc_ref)

        if ragged:
            # Steady state: plain partial sum -- no mask work in the hot loop.
            @pl.when(s < ns - 1)
            def _steady():
                acc_ref[...] += jnp.sum(x_ref[...].astype(jnp.float32), axis=1)

            # Final (ragged) tile only: mask the padded tail, then accumulate.
            @pl.when(s == ns - 1)
            def _tail():
                x = x_ref[...].astype(jnp.float32)              # [TB, TS, H]
                pos = lax.broadcasted_iota(jnp.int32, x.shape, 1) + s * tile_s
                x = jnp.where(pos < seq_len, x, 0.0)
                acc_ref[...] += jnp.sum(x, axis=1)
        else:
            acc_ref[...] += jnp.sum(x_ref[...].astype(jnp.float32), axis=1)

        # MLP head as the epilogue of the reduction (Dropout -> identity).
        @pl.when(s == ns - 1)
        def _finalize():
            pooled = acc_ref[...] * inv_s                       # mean over true S
            h1 = jnp.dot(pooled.astype(w1_ref.dtype), w1_ref[...],
                         preferred_element_type=jnp.float32)
            h1 = jnp.maximum(h1 + b1_ref[...], 0.0)             # [TB, 256]
            h2 = jnp.dot(h1.astype(w2_ref.dtype), w2_ref[...],
                         preferred_element_type=jnp.float32)
            h2 = jnp.maximum(h2 + b2_ref[...], 0.0)             # [TB, 128]
            out = jnp.dot(h2.astype(w3_ref.dtype), w3_ref[...],
                          preferred_element_type=jnp.float32)
            o_ref[...] = (out + b3_ref[...]).astype(o_ref.dtype)  # [TB, 3]

    return kernel


def _tpu_vmem_capacity_bytes():
    """Physical VMEM per core; defensive fallback when the query is absent."""
    try:
        info = pltpu.get_tpu_info()
        return int(getattr(info, "vmem_capacity_bytes", 128 << 20))
    except Exception:
        return 128 << 20


def _choose_tile_b(batch, hidden, itemsize, per_buffer_target):
    """Batch tile from the VMEM budget; >=2 blocks when B>=16 (v7x 2 TCs)."""
    tb = batch
    if batch >= 16:
        # Cap at B//2 (multiple of 8, min 8) so the parallel axis shards
        # across both TensorCores on v7x.
        tb = min(tb, max(8, ((batch // 2) // 8) * 8))
    # Even the smallest legal sequence tile (8 rows) must fit one x buffer.
    max_tb = per_buffer_target // max(1, 8 * hidden * itemsize)
    if 0 < max_tb < tb:
        tb = int(max_tb)
        if tb >= 8:
            tb = (tb // 8) * 8
    tb = max(1, min(tb, batch))
    # Output block (tb, 3) needs tb % 8 == 0 unless tb == batch.
    if tb != batch and tb % 8 != 0:
        tb = min(batch, ((tb + 7) // 8) * 8)
    return tb


def _choose_tile_s(seq_len, tile_b, hidden, itemsize, target_bytes):
    """Sequence tile: ~target bytes per buffer, multiple of 8 (sublane rule)."""
    per_row = max(1, tile_b * hidden * itemsize)
    ts = target_bytes // per_row
    ts = max(8, (ts // 8) * 8)
    if ts >= seq_len:
        return seq_len          # single full-extent tile (always legal)
    return int(ts)


def wind_turbine_head(last_hidden_state, params, *, tile_b=None, tile_s=None):
    """Mean-pool over seq + 3-layer MLP head, one streaming Pallas call.

    Args:
      last_hidden_state: [B, S, H] (f32 or bf16) output of the Mamba backbone.
      params: dict with w1 [H,256], b1 [1,256], w2 [256,128], b2 [1,128],
              w3 [128,3], b3 [1,3]; weights pre-transposed to [in, out] and
              preferably bf16 (biases f32).

    Returns:
      [B, 3] float32 logits.
    """
    B, S, H = last_hidden_state.shape
    itemsize = jnp.dtype(last_hidden_state.dtype).itemsize

    vmem_cap = _tpu_vmem_capacity_bytes()
    # Per-x-buffer target: smaller on 64 MiB-VMEM chips (v7x), larger on the
    # 128 MiB chips (v5e/v6e).  x stays double-buffered either way.
    per_buffer_target = (8 << 20) if vmem_cap <= (64 << 20) else (12 << 20)

    tb = tile_b if tile_b is not None else _choose_tile_b(
        B, H, itemsize, per_buffer_target)
    ts = tile_s if tile_s is not None else _choose_tile_s(
        S, tb, H, itemsize, per_buffer_target)
    nb = pl.cdiv(B, tb)
    ns = pl.cdiv(S, ts)

    kernel = _make_head_kernel(S, ts)

    weight_bytes = sum(int(v.size) * jnp.dtype(v.dtype).itemsize
                       for v in params.values())
    x_tile_bytes = tb * ts * H * itemsize
    acc_bytes = tb * H * 4
    # Explicit VMEM budget: 2 x buffers + weights (counted twice for safety) +
    # accumulator + compiler headroom, clamped to ~90% of physical VMEM.
    vmem_limit = 2 * x_tile_bytes + 2 * weight_bytes + acc_bytes + (8 << 20)
    vmem_limit = int(min(max(vmem_limit, 32 << 20), int(0.9 * vmem_cap)))

    cost = pl.CostEstimate(
        flops=2 * B * (H * 256 + 256 * 128 + 128 * 3) + B * S * H,
        transcendentals=0,
        # Weights are re-streamed once per batch block (nb times).
        bytes_accessed=B * S * H * itemsize + nb * weight_bytes + B * 3 * 4,
    )

    # If profiling on v5e/v6e shows exposed DMA even with large tiles, raise
    # x_spec to pipeline_mode=pl.Buffered(3); keep 2 on v7x (64 MiB VMEM).
    x_spec = pl.BlockSpec((tb, ts, H), lambda b, s: (b, s, 0))
    out_spec = pl.BlockSpec((tb, 3), lambda b, s: (b, 0))

    def build(single_buffer_weights):
        def const_spec(arr):
            # Full-array block, constant index_map -> never re-DMA'd across S.
            if single_buffer_weights:
                return pl.BlockSpec(arr.shape, lambda b, s: (0, 0),
                                    pipeline_mode=pl.Buffered(1))
            return pl.BlockSpec(arr.shape, lambda b, s: (0, 0))

        in_specs = [
            x_spec,
            const_spec(params["w1"]), const_spec(params["b1"]),
            const_spec(params["w2"]), const_spec(params["b2"]),
            const_spec(params["w3"]), const_spec(params["b3"]),
        ]
        return pl.pallas_call(
            kernel,
            out_shape=jax.ShapeDtypeStruct((B, 3), jnp.float32),
            grid=(nb, ns),
            in_specs=in_specs,
            out_specs=out_spec,
            scratch_shapes=[pltpu.VMEM((tb, H), jnp.float32)],
            compiler_params=pltpu.CompilerParams(
                dimension_semantics=("parallel", "arbitrary"),
                vmem_limit_bytes=vmem_limit),
            cost_estimate=cost,
        )

    args = (last_hidden_state,
            params["w1"], params["b1"],
            params["w2"], params["b2"],
            params["w3"], params["b3"])
    try:
        # Single-buffer the constant weight/bias inputs (frees VMEM headroom,
        # most valuable under v7x's 64 MiB ceiling).
        return build(True)(*args)
    except Exception:
        # Fallback if pipeline_mode=Buffered(1) is unsupported in this build.
        return build(False)(*args)


def init_params(key, hidden_size, weight_dtype=jnp.bfloat16):
    """Deterministic synthetic init for the FC head (shapes from the module)."""
    k1, k2, k3 = jax.random.split(key, 3)
    scale = lambda fan_in: 1.0 / jnp.sqrt(jnp.float32(fan_in))
    return {
        # Stored as [in, out] (transpose of PyTorch's [out, in]); bf16 weights
        # feed the MXU directly and halve the weight HBM/VMEM footprint.
        "w1": (jax.random.normal(k1, (hidden_size, 256), jnp.float32)
               * scale(hidden_size)).astype(weight_dtype),
        "b1": jnp.zeros((1, 256), jnp.float32),
        "w2": (jax.random.normal(k2, (256, 128), jnp.float32)
               * scale(256)).astype(weight_dtype),
        "b2": jnp.zeros((1, 128), jnp.float32),
        "w3": (jax.random.normal(k3, (128, 3), jnp.float32)
               * scale(128)).astype(weight_dtype),
        "b3": jnp.zeros((1, 3), jnp.float32),
    }


if __name__ == "__main__":
    # Small shapes consistent with the forward: batch=2, seq=8, hidden=32.
    B, S, H = 2, 8, 32
    key = jax.random.PRNGKey(0)
    k_x, k_p = jax.random.split(key)

    # Stand-in for mamba(**tokenizer(x)).last_hidden_state (see TODO(synk)).
    # Streamed in bf16 to halve HBM bytes; the kernel accumulates in f32.
    last_hidden_state = jax.random.normal(
        k_x, (B, S, H), jnp.float32).astype(jnp.bfloat16)
    params = init_params(k_p, H)

    out = jax.block_until_ready(wind_turbine_head(last_hidden_state, params))

    # Pure-JAX reference of the same math (same bf16 casts as the kernel).
    x32 = last_hidden_state.astype(jnp.float32)
    pooled = x32.mean(axis=1)
    h1 = jnp.maximum(
        jnp.dot(pooled.astype(params["w1"].dtype), params["w1"],
                preferred_element_type=jnp.float32) + params["b1"], 0.0)
    h2 = jnp.maximum(
        jnp.dot(h1.astype(params["w2"].dtype), params["w2"],
                preferred_element_type=jnp.float32) + params["b2"], 0.0)
    ref = jnp.dot(h2.astype(params["w3"].dtype), params["w3"],
                  preferred_element_type=jnp.float32) + params["b3"]

    assert out.shape == (B, 3)
    assert jnp.allclose(out, ref, atol=1e-2, rtol=1e-2), (out, ref)
    print("KERNEL_OK")
</pallas_src>

<mosaic_0001>
module attributes {stable_mosaic.version = 11 : i64} {
  func.func @kernel(%arg0: i32, %arg1: i32, %arg2: memref<2x8x32xbf16, #tpu.memory_space<vmem>>, %arg3: memref<32x256xbf16, #tpu.memory_space<vmem>>, %arg4: memref<1x256xf32, #tpu.memory_space<vmem>>, %arg5: memref<256x128xbf16, #tpu.memory_space<vmem>>, %arg6: memref<1x128xf32, #tpu.memory_space<vmem>>, %arg7: memref<128x3xbf16, #tpu.memory_space<vmem>>, %arg8: memref<1x3xf32, #tpu.memory_space<vmem>>, %arg9: memref<2x3xf32, #tpu.memory_space<vmem>>, %arg10: memref<2x32xf32, #tpu.memory_space<vmem>>) attributes {dimension_semantics = [#tpu.dimension_semantics<parallel>, #tpu.dimension_semantics<arbitrary>], iteration_bounds = array<i64: 1, 1>, scalar_prefetch = 0 : i64, scratch_operands = 1 : i64, tpu.core_type = #tpu.core_type<tc>, window_params = [{transform_indices = @transform_0, window_bounds = array<i64: 2, 8, 32>}, {pipeline_mode = #tpu.pipeline_mode<synchronous>, transform_indices = @transform_1, window_bounds = array<i64: 32, 256>}, {pipeline_mode = #tpu.pipeline_mode<synchronous>, transform_indices = @transform_2, window_bounds = array<i64: 1, 256>}, {pipeline_mode = #tpu.pipeline_mode<synchronous>, transform_indices = @transform_3, window_bounds = array<i64: 256, 128>}, {pipeline_mode = #tpu.pipeline_mode<synchronous>, transform_indices = @transform_4, window_bounds = array<i64: 1, 128>}, {pipeline_mode = #tpu.pipeline_mode<synchronous>, transform_indices = @transform_5, window_bounds = array<i64: 128, 3>}, {pipeline_mode = #tpu.pipeline_mode<synchronous>, transform_indices = @transform_6, window_bounds = array<i64: 1, 3>}, {transform_indices = @transform_7, window_bounds = array<i64: 2, 3>}]} {
    %c0_i32 = arith.constant 0 : i32
    %0 = arith.cmpi eq, %arg1, %c0_i32 : i32
    %1 = arith.extui %0 : i1 to i32
    %c0_i32_0 = arith.constant 0 : i32
    %2 = arith.cmpi ne, %1, %c0_i32_0 : i32
    scf.if %2 {
      %cst_9 = arith.constant 0.000000e+00 : f32
      %12 = vector.broadcast %cst_9 : f32 to vector<2x32xf32>
      %c0_10 = arith.constant 0 : index
      %c0_11 = arith.constant 0 : index
      %13 = vector.load %arg10[%c0_10, %c0_11] : memref<2x32xf32, #tpu.memory_space<vmem>>, vector<2x32xf32>
      tpu.vector_store %arg10[%c0_10, %c0_11], %12 {strides = array<i32>} : memref<2x32xf32, #tpu.memory_space<vmem>>, vector<2x32xf32>,
    } else {
    }
    %c0 = arith.constant 0 : index
    %c0_1 = arith.constant 0 : index
    %3 = vector.load %arg10[%c0, %c0_1] : memref<2x32xf32, #tpu.memory_space<vmem>>, vector<2x32xf32>
    %c0_2 = arith.constant 0 : index
    %c0_3 = arith.constant 0 : index
    %c0_4 = arith.constant 0 : index
    %4 = vector.load %arg2[%c0_2, %c0_3, %c0_4] : memref<2x8x32xbf16, #tpu.memory_space<vmem>>, vector<2x8x32xbf16>
    %5 = arith.extf %4 : vector<2x8x32xbf16> to vector<2x8x32xf32>
    %cst = arith.constant dense<0.000000e+00> : vector<2x32xf32>
    %6 = vector.multi_reduction <add>, %5, %cst [1] : vector<2x8x32xf32> to vector<2x32xf32>
    %7 = arith.addf %3, %6 : vector<2x32xf32>
    %c0_5 = arith.constant 0 : index
    %c0_6 = arith.constant 0 : index
    %8 = vector.load %arg10[%c0_5, %c0_6] : memref<2x32xf32, #tpu.memory_space<vmem>>, vector<2x32xf32>
    tpu.vector_store %arg10[%c0_5, %c0_6], %7 {strides = array<i32>} : memref<2x32xf32, #tpu.memory_space<vmem>>, vector<2x32xf32>,
    %c0_i32_7 = arith.constant 0 : i32
    %9 = arith.cmpi eq, %arg1, %c0_i32_7 : i32
    %10 = arith.extui %9 : i1 to i32
    %c0_i32_8 = arith.constant 0 : i32
    %11 = arith.cmpi ne, %10, %c0_i32_8 : i32
    scf.if %11 {
      %c0_9 = arith.constant 0 : index
      %c0_10 = arith.constant 0 : index
      %12 = vector.load %arg10[%c0_9, %c0_10] : memref<2x32xf32, #tpu.memory_space<vmem>>, vector<2x32xf32>
      %cst_11 = arith.constant 1.250000e-01 : f32
      %13 = vector.broadcast %cst_11 : f32 to vector<2x32xf32>
      %14 = arith.mulf %12, %13 : vector<2x32xf32>
      %15 = arith.truncf %14 : vector<2x32xf32> to vector<2x32xbf16>
      %c0_12 = arith.constant 0 : index
      %c0_13 = arith.constant 0 : index
      %16 = vector.load %arg3[%c0_12, %c0_13] : memref<32x256xbf16, #tpu.memory_space<vmem>>, vector<32x256xbf16>
      %cst_14 = arith.constant dense<0.000000e+00> : vector<2x256xf32>
      %17 = tpu.matmul %15, %16, %cst_14 {dimension_numbers = #tpu.dot_dimension_numbers<[1], [0], [0], [1], [0, 0, 1, 1], [], []>} : vector<2x32xbf16>, vector<32x256xbf16>, vector<2x256xf32> -> vector<2x256xf32>
      %c0_15 = arith.constant 0 : index
      %c0_16 = arith.constant 0 : index
      %18 = vector.load %arg4[%c0_15, %c0_16] : memref<1x256xf32, #tpu.memory_space<vmem>>, vector<1x256xf32>
      %19 = vector.broadcast %18 : vector<1x256xf32> to vector<2x256xf32>
      %20 = arith.addf %17, %19 : vector<2x256xf32>
      %cst_17 = arith.constant 0.000000e+00 : f32
      %21 = vector.broadcast %cst_17 : f32 to vector<2x256xf32>
      %22 = arith.maximumf %20, %21 : vector<2x256xf32>
      %23 = arith.truncf %22 : vector<2x256xf32> to vector<2x256xbf16>
      %c0_18 = arith.constant 0 : index
      %c0_19 = arith.constant 0 : index
      %24 = vector.load %arg5[%c0_18, %c0_19] : memref<256x128xbf16, #tpu.memory_space<vmem>>, vector<256x128xbf16>
      %cst_20 = arith.constant dense<0.000000e+00> : vector<2x128xf32>
      %25 = tpu.matmul %23, %24, %cst_20 {dimension_numbers = #tpu.dot_dimension_numbers<[1], [0], [0], [1], [0, 0, 1, 1], [], []>} : vector<2x256xbf16>, vector<256x128xbf16>, vector<2x128xf32> -> vector<2x128xf32>
      %c0_21 = arith.constant 0 : index
      %c0_22 = arith.constant 0 : index
      %26 = vector.load %arg6[%c0_21, %c0_22] : memref<1x128xf32, #tpu.memory_space<vmem>>, vector<1x128xf32>
      %27 = vector.broadcast %26 : vector<1x128xf32> to vector<2x128xf32>
      %28 = arith.addf %25, %27 : vector<2x128xf32>
      %cst_23 = arith.constant 0.000000e+00 : f32
      %29 = vector.broadcast %cst_23 : f32 to vector<2x128xf32>
      %30 = arith.maximumf %28, %29 : vector<2x128xf32>
      %31 = arith.truncf %30 : vector<2x128xf32> to vector<2x128xbf16>
      %c0_24 = arith.constant 0 : index
      %c0_25 = arith.constant 0 : index
      %32 = vector.load %arg7[%c0_24, %c0_25] : memref<128x3xbf16, #tpu.memory_space<vmem>>, vector<128x3xbf16>
      %cst_26 = arith.constant dense<0.000000e+00> : vector<2x3xf32>
      %33 = tpu.matmul %31, %32, %cst_26 {dimension_numbers = #tpu.dot_dimension_numbers<[1], [0], [0], [1], [0, 0, 1, 1], [], []>} : vector<2x128xbf16>, vector<128x3xbf16>, vector<2x3xf32> -> vector<2x3xf32>
      %c0_27 = arith.constant 0 : index
      %c0_28 = arith.constant 0 : index
      %34 = vector.load %arg8[%c0_27, %c0_28] : memref<1x3xf32, #tpu.memory_space<vmem>>, vector<1x3xf32>
      %35 = vector.broadcast %34 : vector<1x3xf32> to vector<2x3xf32>
      %36 = arith.addf %33, %35 : vector<2x3xf32>
      %c0_29 = arith.constant 0 : index
      %c0_30 = arith.constant 0 : index
      %37 = vector.load %arg9[%c0_29, %c0_30] : memref<2x3xf32, #tpu.memory_space<vmem>>, vector<2x3xf32>
      tpu.vector_store %arg9[%c0_29, %c0_30], %36 {strides = array<i32>} : memref<2x3xf32, #tpu.memory_space<vmem>>, vector<2x3xf32>,
    } else {
    }
    return
  }
  func.func @transform_0(%arg0: i32, %arg1: i32) -> (i32, i32, i32) {
    %c0_i32 = arith.constant 0 : i32
    %c0_i32_0 = arith.constant 0 : i32
    return %arg0, %arg1, %c0_i32 : i32, i32, i32
  }
  func.func @transform_1(%arg0: i32, %arg1: i32) -> (i32, i32) {
    %c0_i32 = arith.constant 0 : i32
    %c0_i32_0 = arith.constant 0 : i32
    %c0_i32_1 = arith.constant 0 : i32
    return %c0_i32, %c0_i32_0 : i32, i32
  }
  func.func @transform_2(%arg0: i32, %arg1: i32) -> (i32, i32) {
    %c0_i32 = arith.constant 0 : i32
    %c0_i32_0 = arith.constant 0 : i32
    %c0_i32_1 = arith.constant 0 : i32
    return %c0_i32, %c0_i32_0 : i32, i32
  }
  func.func @transform_3(%arg0: i32, %arg1: i32) -> (i32, i32) {
    %c0_i32 = arith.constant 0 : i32
    %c0_i32_0 = arith.constant 0 : i32
    %c0_i32_1 = arith.constant 0 : i32
    return %c0_i32, %c0_i32_0 : i32, i32
  }
  func.func @transform_4(%arg0: i32, %arg1: i32) -> (i32, i32) {
    %c0_i32 = arith.constant 0 : i32
    %c0_i32_0 = arith.constant 0 : i32
    %c0_i32_1 = arith.constant 0 : i32
    return %c0_i32, %c0_i32_0 : i32, i32
  }
  func.func @transform_5(%arg0: i32, %arg1: i32) -> (i32, i32) {
    %c0_i32 = arith.constant 0 : i32
    %c0_i32_0 = arith.constant 0 : i32
    %c0_i32_1 = arith.constant 0 : i32
    return %c0_i32, %c0_i32_0 : i32, i32
  }
  func.func @transform_6(%arg0: i32, %arg1: i32) -> (i32, i32) {
    %c0_i32 = arith.constant 0 : i32
    %c0_i32_0 = arith.constant 0 : i32
    %c0_i32_1 = arith.constant 0 : i32
    return %c0_i32, %c0_i32_0 : i32, i32
  }
  func.func @transform_7(%arg0: i32, %arg1: i32) -> (i32, i32) {
    %c0_i32 = arith.constant 0 : i32
    %c0_i32_0 = arith.constant 0 : i32
    return %arg0, %c0_i32 : i32, i32
  }
}

module attributes {stable_mosaic.version = 11 : i64} {
  func.func @kernel(%arg0: i32, %arg1: i32, %arg2: memref<2x8x32xbf16, #tpu.memory_space<vmem>>, %arg3: memref<32x256xbf16, #tpu.memory_space<vmem>>, %arg4: memref<1x256xf32, #tpu.memory_space<vmem>>, %arg5: memref<256x128xbf16, #tpu.memory_space<vmem>>, %arg6: memref<1x128xf32, #tpu.memory_space<vmem>>, %arg7: memref<128x3xbf16, #tpu.memory_space<vmem>>, %arg8: memref<1x3xf32, #tpu.memory_space<vmem>>, %arg9: memref<2x3xf32, #tpu.memory_space<vmem>>, %arg10: memref<2x32xf32, #tpu.memory_space<vmem>>) attributes {dimension_semantics = [#tpu.dimension_semantics<parallel>, #tpu.dimension_semantics<arbitrary>], iteration_bounds = array<i64: 1, 1>, scalar_prefetch = 0 : i64, scratch_operands = 1 : i64, tpu.core_type = #tpu.core_type<tc>, window_params = [{transform_indices = @transform_0, window_bounds = array<i64: 2, 8, 32>}, {pipeline_mode = #tpu.pipeline_mode<synchronous>, transform_indices = @transform_1, window_bounds = array<i64: 32, 256>}, {pipeline_mode = #tpu.pipeline_mode<synchronous>, transform_indices = @transform_2, window_bounds = array<i64: 1, 256>}, {pipeline_mode = #tpu.pipeline_mode<synchronous>, transform_indices = @transform_3, window_bounds = array<i64: 256, 128>}, {pipeline_mode = #tpu.pipeline_mode<synchronous>, transform_indices = @transform_4, window_bounds = array<i64: 1, 128>}, {pipeline_mode = #tpu.pipeline_mode<synchronous>, transform_indices = @transform_5, window_bounds = array<i64: 128, 3>}, {pipeline_mode = #tpu.pipeline_mode<synchronous>, transform_indices = @transform_6, window_bounds = array<i64: 1, 3>}, {transform_indices = @transform_7, window_bounds = array<i64: 2, 3>}]} {
    %c0_i32 = arith.constant 0 : i32
    %0 = arith.cmpi eq, %arg1, %c0_i32 : i32
    %1 = arith.extui %0 : i1 to i32
    %c0_i32_0 = arith.constant 0 : i32
    %2 = arith.cmpi ne, %1, %c0_i32_0 : i32
    scf.if %2 {
      %cst_9 = arith.constant 0.000000e+00 : f32
      %12 = vector.broadcast %cst_9 : f32 to vector<2x32xf32>
      %c0_10 = arith.constant 0 : index
      %c0_11 = arith.constant 0 : index
      %13 = vector.load %arg10[%c0_10, %c0_11] : memref<2x32xf32, #tpu.memory_space<vmem>>, vector<2x32xf32>
      tpu.vector_store %arg10[%c0_10, %c0_11], %12 {strides = array<i32>} : memref<2x32xf32, #tpu.memory_space<vmem>>, vector<2x32xf32>,
    } else {
    }
    %c0 = arith.constant 0 : index
    %c0_1 = arith.constant 0 : index
    %3 = vector.load %arg10[%c0, %c0_1] : memref<2x32xf32, #tpu.memory_space<vmem>>, vector<2x32xf32>
    %c0_2 = arith.constant 0 : index
    %c0_3 = arith.constant 0 : index
    %c0_4 = arith.constant 0 : index
    %4 = vector.load %arg2[%c0_2, %c0_3, %c0_4] : memref<2x8x32xbf16, #tpu.memory_space<vmem>>, vector<2x8x32xbf16>
    %5 = arith.extf %4 : vector<2x8x32xbf16> to vector<2x8x32xf32>
    %cst = arith.constant dense<0.000000e+00> : vector<2x32xf32>
    %6 = vector.multi_reduction <add>, %5, %cst [1] : vector<2x8x32xf32> to vector<2x32xf32>
    %7 = arith.addf %3, %6 : vector<2x32xf32>
    %c0_5 = arith.constant 0 : index
    %c0_6 = arith.constant 0 : index
    %8 = vector.load %arg10[%c0_5, %c0_6] : memref<2x32xf32, #tpu.memory_space<vmem>>, vector<2x32xf32>
    tpu.vector_store %arg10[%c0_5, %c0_6], %7 {strides = array<i32>} : memref<2x32xf32, #tpu.memory_space<vmem>>, vector<2x32xf32>,
    %c0_i32_7 = arith.constant 0 : i32
    %9 = arith.cmpi eq, %arg1, %c0_i32_7 : i32
    %10 = arith.extui %9 : i1 to i32
    %c0_i32_8 = arith.constant 0 : i32
    %11 = arith.cmpi ne, %10, %c0_i32_8 : i32
    scf.if %11 {
      %c0_9 = arith.constant 0 : index
      %c0_10 = arith.constant 0 : index
      %12 = vector.load %arg10[%c0_9, %c0_10] : memref<2x32xf32, #tpu.memory_space<vmem>>, vector<2x32xf32>
      %cst_11 = arith.constant 1.250000e-01 : f32
      %13 = vector.broadcast %cst_11 : f32 to vector<2x32xf32>
      %14 = arith.mulf %12, %13 : vector<2x32xf32>
      %15 = arith.truncf %14 : vector<2x32xf32> to vector<2x32xbf16>
      %c0_12 = arith.constant 0 : index
      %c0_13 = arith.constant 0 : index
      %16 = vector.load %arg3[%c0_12, %c0_13] : memref<32x256xbf16, #tpu.memory_space<vmem>>, vector<32x256xbf16>
      %cst_14 = arith.constant dense<0.000000e+00> : vector<2x256xf32>
      %17 = tpu.matmul %15, %16, %cst_14 {dimension_numbers = #tpu.dot_dimension_numbers<[1], [0], [0], [1], [0, 0, 1, 1], [], []>} : vector<2x32xbf16>, vector<32x256xbf16>, vector<2x256xf32> -> vector<2x256xf32>
      %c0_15 = arith.constant 0 : index
      %c0_16 = arith.constant 0 : index
      %18 = vector.load %arg4[%c0_15, %c0_16] : memref<1x256xf32, #tpu.memory_space<vmem>>, vector<1x256xf32>
      %19 = vector.broadcast %18 : vector<1x256xf32> to vector<2x256xf32>
      %20 = arith.addf %17, %19 : vector<2x256xf32>
      %cst_17 = arith.constant 0.000000e+00 : f32
      %21 = vector.broadcast %cst_17 : f32 to vector<2x256xf32>
      %22 = arith.maximumf %20, %21 : vector<2x256xf32>
      %23 = arith.truncf %22 : vector<2x256xf32> to vector<2x256xbf16>
      %c0_18 = arith.constant 0 : index
      %c0_19 = arith.constant 0 : index
      %24 = vector.load %arg5[%c0_18, %c0_19] : memref<256x128xbf16, #tpu.memory_space<vmem>>, vector<256x128xbf16>
      %cst_20 = arith.constant dense<0.000000e+00> : vector<2x128xf32>
      %25 = tpu.matmul %23, %24, %cst_20 {dimension_numbers = #tpu.dot_dimension_numbers<[1], [0], [0], [1], [0, 0, 1, 1], [], []>} : vector<2x256xbf16>, vector<256x128xbf16>, vector<2x128xf32> -> vector<2x128xf32>
      %c0_21 = arith.constant 0 : index
      %c0_22 = arith.constant 0 : index
      %26 = vector.load %arg6[%c0_21, %c0_22] : memref<1x128xf32, #tpu.memory_space<vmem>>, vector<1x128xf32>
      %27 = vector.broadcast %26 : vector<1x128xf32> to vector<2x128xf32>
      %28 = arith.addf %25, %27 : vector<2x128xf32>
      %cst_23 = arith.constant 0.000000e+00 : f32
      %29 = vector.broadcast %cst_23 : f32 to vector<2x128xf32>
      %30 = arith.maximumf %28, %29 : vector<2x128xf32>
      %31 = arith.truncf %30 : vector<2x128xf32> to vector<2x128xbf16>
      %c0_24 = arith.constant 0 : index
      %c0_25 = arith.constant 0 : index
      %32 = vector.load %arg7[%c0_24, %c0_25] : memref<128x3xbf16, #tpu.memory_space<vmem>>, vector<128x3xbf16>
      %cst_26 = arith.constant dense<0.000000e+00> : vector<2x3xf32>
      %33 = tpu.matmul %31, %32, %cst_26 {dimension_numbers = #tpu.dot_dimension_numbers<[1], [0], [0], [1], [0, 0, 1, 1], [], []>} : vector<2x128xbf16>, vector<128x3xbf16>, vector<2x3xf32> -> vector<2x3xf32>
      %c0_27 = arith.constant 0 : index
      %c0_28 = arith.constant 0 : index
      %34 = vector.load %arg8[%c0_27, %c0_28] : memref<1x3xf32, #tpu.memory_space<vmem>>, vector<1x3xf32>
      %35 = vector.broadcast %34 : vector<1x3xf32> to vector<2x3xf32>
      %36 = arith.addf %33, %35 : vector<2x3xf32>
      %c0_29 = arith.constant 0 : index
      %c0_30 = arith.constant 0 : index
      %37 = vector.load %arg9[%c0_29, %c0_30] : memref<2x3xf32, #tpu.memory_space<vmem>>, vector<2x3xf32>
      tpu.vector_store %arg9[%c0_29, %c0_30], %36 {strides = array<i32>} : memref<2x3xf32, #tpu.memory_space<vmem>>, vector<2x3xf32>,
    } else {
    }
    return
  }
  func.func @transform_0(%arg0: i32, %arg1: i32) -> (i32, i32, i32) {
    %c0_i32 = arith.constant 0 : i32
    %c0_i32_0 = arith.constant 0 : i32
    return %arg0, %arg1, %c0_i32 : i32, i32, i32
  }
  func.func @transform_1(%arg0: i32, %arg1: i32) -> (i32, i32) {
    %c0_i32 = arith.constant 0 : i32
    %c0_i32_0 = arith.constant 0 : i32
    %c0_i32_1 = arith.constant 0 : i32
    return %c0_i32, %c0_i32_0 : i32, i32
  }
  func.func @transform_2(%arg0: i32, %arg1: i32) -> (i32, i32) {
    %c0_i32 = arith.constant 0 : i32
    %c0_i32_0 = arith.constant 0 : i32
    %c0_i32_1 = arith.constant 0 : i32
    return %c0_i32, %c0_i32_0 : i32, i32
  }
  func.func @transform_3(%arg0: i32, %arg1: i32) -> (i32, i32) {
    %c0_i32 = arith.constant 0 : i32
    %c0_i32_0 = arith.constant 0 : i32
    %c0_i32_1 = arith.constant 0 : i32
    return %c0_i32, %c0_i32_0 : i32, i32
  }
  func.func @transform_4(%arg0: i32, %arg1: i32) -> (i32, i32) {
    %c0_i32 = arith.constant 0 : i32
    %c0_i32_0 = arith.constant 0 : i32
    %c0_i32_1 = arith.constant 0 : i32
    return %c0_i32, %c0_i32_0 : i32, i32
  }
  func.func @transform_5(%arg0: i32, %arg1: i32) -> (i32, i32) {
    %c0_i32 = arith.constant 0 : i32
    %c0_i32_0 = arith.constant 0 : i32
    %c0_i32_1 = arith.constant 0 : i32
    return %c0_i32, %c0_i32_0 : i32, i32
  }
  func.func @transform_6(%arg0: i32, %arg1: i32) -> (i32, i32) {
    %c0_i32 = arith.constant 0 : i32
    %c0_i32_0 = arith.constant 0 : i32
    %c0_i32_1 = arith.constant 0 : i32
    return %c0_i32, %c0_i32_0 : i32, i32
  }
  func.func @transform_7(%arg0: i32, %arg1: i32) -> (i32, i32) {
    %c0_i32 = arith.constant 0 : i32
    %c0_i32_0 = arith.constant 0 : i32
    return %arg0, %c0_i32 : i32, i32
  }
}

</mosaic_0001>

<llo_original>
// kernel: tpu_custom_call.1
$region0: #{tpu_custom_call.1}
  #allocation0 [shape = 'u32[]', space=smem, size = 0x4, offset = 0x4, fixed_abs, tag = 'smem constant byte address 0x4 - core index']
  #allocation1 [shape = 'u32[144,128]{1,0:T(1,128)}', space=vmem, size = 0x12000, scoped, tag = 'internal scratch']
  #allocation2 [shape = 'f32[2,32]{1,0:T(2,128)}', space=vmem, size = 0x400, scoped, tag = 'scratch operand']
  %s0 = inlined_call_operand.vmem [shape: bf16[2,8,32], index: 0, kind: input, shape index: {}]
  %s1 = inlined_call_operand.vmem [shape: bf16[32,256], index: 1, kind: input, shape index: {}]
  %s2 = inlined_call_operand.vmem [shape: f32[1,256], index: 2, kind: input, shape index: {}]
  %s3 = inlined_call_operand.hbm [shape: bf16[256,128], index: 3, kind: input, shape index: {}]
  %s4 = inlined_call_operand.vmem [shape: f32[1,128], index: 4, kind: input, shape index: {}]
  %s5 = inlined_call_operand.vmem [shape: bf16[128,3], index: 5, kind: input, shape index: {}]
  %s6 = inlined_call_operand.vmem [shape: f32[1,3], index: 6, kind: input, shape index: {}]
  %s7 = inlined_call_operand.hbm [shape: f32[2,3], index: 7, kind: output, shape index: {}]
  %s8 = sld [smem:[#allocation0]]
  $region50: #{tpu_custom_call.1} parent=0
    _
  %s10 = ssub.s32 1, %s8
  %s11 = scalar_select 0, %s10, %s8
  $region1: #{tpu_custom_call.1} parent=0
    #allocation3 [shape = 'u8[65536]{0}', space=vmem, size = 0x10000, scoped, tag = 'input window, operand 3, single buffered']
    #allocation4 [shape = 's32[1]{0}', space=sflag, size = 0x4, scoped, tag = 'scoped memory for tpu_custom_call.1']
    #allocation5 [shape = 's32[1]{0}', space=sflag, size = 0x4, scoped, tag = 'scoped memory for tpu_custom_call.1']
    #allocation6 [shape = 'u8[1024]{0}', space=vmem, size = 0x400, scoped, tag = 'output window, operand 0, single buffered']
    %12 = vsyncpa [#allocation4], 0
    %13 = vsyncpa [#allocation5], 0
    // Predicated region
    $region2: #{tpu_custom_call.1} parent=1 // pred_check
      _
    $region3: #{tpu_custom_call.1} parent=1 // pred_check_branch
      %15 = sbr.rel (0) target = $region5
    $region4: #{tpu_custom_call.1} parent=1 // pred_region
      _
    $region5: #{tpu_custom_call.1} parent=1 // pred_fallthru
      _
    // Predicated region
    $region6: #{tpu_custom_call.1} parent=1 // pred_check
      _
    $region7: #{tpu_custom_call.1} parent=1 // pred_check_branch
      %17 = sbr.rel (0) target = $region9
    $region8: #{tpu_custom_call.1} parent=1 // pred_region
      _
    $region9: #{tpu_custom_call.1} parent=1 // pred_fallthru
      _
    // Predicated region
    $region10: #{tpu_custom_call.1} parent=1 // pred_check
      _
    $region11: #{tpu_custom_call.1} parent=1 // pred_check_branch
      %19 = sbr.rel (0) target = $region13
    $region12: #{tpu_custom_call.1} parent=1 // pred_region
      _
    $region13: #{tpu_custom_call.1} parent=1 // pred_fallthru
      _
    // Predicated region
    $region14: #{tpu_custom_call.1} parent=1 // pred_check
      _
    $region15: #{tpu_custom_call.1} parent=1 // pred_check_branch
      %21 = sbr.rel (0) target = $region17
    $region16: #{tpu_custom_call.1} parent=1 // pred_region
      %s23 = ssub.s32 2048, 2048
      %24 = vsyncadd [#allocation4], %s23
      %s25 = sshll.u32 [#allocation3], 4
      %s26 = int_to_ptr.vmem [resolvable:$true] %s25
      %31 = dma.hbm_to_vmem [thread:$0]  %s3, 2048, %s26, [#allocation4], 64, 64, 4
    $region17: #{tpu_custom_call.1} parent=1 // pred_fallthru
      _
    // Predicated region
    $region18: #{tpu_custom_call.1} parent=1 // pred_check
      _
    $region19: #{tpu_custom_call.1} parent=1 // pred_check_branch
      %33 = sbr.rel (0) target = $region21
    $region20: #{tpu_custom_call.1} parent=1 // pred_region
      _
    $region21: #{tpu_custom_call.1} parent=1 // pred_fallthru
      _
    // Predicated region
    $region22: #{tpu_custom_call.1} parent=1 // pred_check
      _
    $region23: #{tpu_custom_call.1} parent=1 // pred_check_branch
      %35 = sbr.rel (0) target = $region25
    $region24: #{tpu_custom_call.1} parent=1 // pred_region
      _
    $region25: #{tpu_custom_call.1} parent=1 // pred_fallthru
      _
    // Predicated region
    $region26: #{tpu_custom_call.1} parent=1 // pred_check
      _
    $region27: #{tpu_custom_call.1} parent=1 // pred_check_branch
      %37 = sbr.rel (0) target = $region29
    $region28: #{tpu_custom_call.1} parent=1 // pred_region
      _
    $region29: #{tpu_custom_call.1} parent=1 // pred_fallthru
      _
    // Predicated region
    $region30: #{tpu_custom_call.1} parent=1 // pred_check
      _
    $region31: #{tpu_custom_call.1} parent=1 // pred_check_branch
      %39 = sbr.rel (0) target = $region33
    $region32: #{tpu_custom_call.1} parent=1 // pred_region
      %40 = dma.done [#allocation4], 2048
    $region33: #{tpu_custom_call.1} parent=1 // pred_fallthru
      _
    %p42 = scmp.eq.s32.totalorder 0, 0
    // Predicated region
    $region34: #{tpu_custom_call.1} parent=1 // pred_check
      %p43 = pneg %p42
    $region35: #{tpu_custom_call.1} parent=1 // pred_check_branch
      %45 = sbr.rel (%p43) target = $region37
    $region36: #{tpu_custom_call.1} parent=1 // pred_region
      %vm46 = vcmask 254976
      %47 = vst.msk [vmem:[#allocation2] sm:$0x3] %vm46, 0.0
    $region37: #{tpu_custom_call.1} parent=1 // pred_fallthru
      _
    %v48 = vld [vmem:[#allocation2] sm:$0x3]
    %v49 = vld [vmem:[%s0] sm:$0xf]
    %v50 = vld [vmem:[%s0 + $0x4] sm:$0xf]
    %v51 = vunpack.c.l.bf16 %v49
    %v52 = vunpack.c.l.bf16 %v50
    %vm53 = vcmask 261120
    %v54 = vsel %vm53, %v51, 0.0
    %v55 = vrot.slane %v54, 4
    %v56 = vadd.f32 %v54, %v55
    %v57 = vrot.slane %v56, 2
    %v58 = vadd.f32 %v56, %v57
    %v59 = vrot.slane %v58, 1
    %v60 = vadd.f32 %v58, %v59
    %v61 = vsel %vm53, %v52, 0.0
    %v62 = vrot.slane %v61, 4
    %v63 = vadd.f32 %v61, %v62
    %v64 = vrot.slane %v63, 2
    %v65 = vadd.f32 %v63, %v64
    %v66 = vrot.slane %v65, 1
    %v67 = vadd.f32 %v65, %v66
    %vm70 = vcmask 1041409
    %v71 = vsel %vm70, %v67, %v60
    %v73 = vadd.f32 %v48, %v71
    %vm74 = vcmask 254976
    %75 = vst.msk [vmem:[#allocation2] sm:$0x3] %vm74, %v73
    // Predicated region
    $region38: #{tpu_custom_call.1} parent=1 // pred_check
      %p76 = pneg %p42
    $region39: #{tpu_custom_call.1} parent=1 // pred_check_branch
      %78 = sbr.rel (%p76) target = $region41
    $region40: #{tpu_custom_call.1} parent=1 // pred_region
      %v79 = vld [vmem:[#allocation2] sm:$0x3]
      %v80 = vmul.f32 %v79, 0.125
      %v81 = vpack.c.bf16 %v80, %v80
      %v82 = vld [vmem:[%s1] sm:$0xff]
      %v83 = vld [vmem:[%s1 + $0x8] sm:$0xff]
      %v84 = vld [vmem:[%s1 + $0x10] sm:$0xff]
      %v85 = vld [vmem:[%s1 + $0x18] sm:$0xff]
      %v86 = vld [vmem:[%s2] sm:$0x3]
      %v88 = vlaneseq
      %v89 = vshrl.u32 %v88, 7
      %v90 = vsub.s32 0, %v89
      %v91 = vrot.slane %v86, %v90
      %v92 = vlaneseq
      %v93 = vshrl.u32 %v92, 7
      %v94 = vsub.s32 1, %v93
      %v95 = vrot.slane %v86, %v94
      %v102 = vunpack.c.l.b16 %v82
      %v103 = vunpack.c.h.b16 %v82
      %v104 = vunpack.c.l.b16 %v83
      %v105 = vunpack.c.h.b16 %v83
      %v106 = vunpack.c.l.b16 %v84
      %v107 = vunpack.c.h.b16 %v84
      %v108 = vunpack.c.l.b16 %v85
      %v109 = vunpack.c.h.b16 %v85
      %v110 = vpack.c.b16 %v104, %v102
      %v111 = vpack.c.b16 %v105, %v103
      %v112 = vpack.c.b16 %v108, %v106
      %v113 = vpack.c.b16 %v109, %v107
      %v119 = vsel %vm53, %v81, 0
      %121 = vmatprep.subr.bf16.mxu0 %v111
      %122 = vmatpush1.bf16.msra.mxu0 %v110
      %123 = vmatprep.subr.bf16.mxu0 %v113
      %124 = vmatpush1.bf16.msra.mxu0 %v112
      %125 = vmatprep.subr.bf16.mxu0 0
      %126 = vmatpush1.bf16.msra.mxu0 0
      %127 = vmatprep.subr.bf16.mxu0 0
      %128 = vmatpush1.bf16.msra.mxu0 0
      %129 = vmatprep.subr.bf16.mxu0 0
      %130 = vmatpush1.bf16.msra.mxu0 0
      %131 = vmatprep.subr.bf16.mxu0 0
      %132 = vmatpush1.bf16.msra.mxu0 0
      %133 = vmatprep.subr.bf16.mxu0 0
      %134 = vmatpush1.bf16.msra.mxu0 0
      %135 = vmatprep.subr.bf16.mxu0 0
      %136 = vmatpush1.bf16.msra.mxu0 0
      %137 = vmatprep.subr.bf16.mxu0 0
      %138 = vmatpush1.bf16.msra.mxu0 0
      %139 = vmatprep.subr.bf16.mxu0 0
      %140 = vmatpush1.bf16.msra.mxu0 0
      %141 = vmatprep.subr.bf16.mxu0 0
      %142 = vmatpush1.bf16.msra.mxu0 0
      %143 = vmatprep.subr.bf16.mxu0 0
      %144 = vmatpush1.bf16.msra.mxu0 0
      %145 = vmatprep.subr.bf16.mxu0 0
      %146 = vmatpush1.bf16.msra.mxu0 0
      %147 = vmatprep.subr.bf16.mxu0 0
      %148 = vmatpush1.bf16.msra.mxu0 0
      %149 = vmatprep.subr.bf16.mxu0 0
      %150 = vmatpush1.bf16.msra.mxu0 0
      %151 = vmatprep.subr.bf16.mxu0 0
      %152 = vmatpush1.bf16.msra.mxu0 0
      %153 = vmatprep.mubr.bf16.mxu0 0
      %154 = vmatmul.mubr.bf16.gmra.mrb[0].mxu0 %v119
      %v155 = vpop.f32.mrb[0].mxu0
      %v156 = vadd.f32 %v91, %v155
      %v157 = vpop.f32.mrb[0].mxu0
      %v158 = vadd.f32 %v95, %v157
      %v159 = vpop.f32.mrb[0].mxu0
      %v160 = vpop.f32.mrb[0].mxu0
      %161 = vdwg.mxu0
      %v162 = vmax.f32 %v156, 0.0
      %v163 = vmax.f32 %v158, 0.0
      %v164 = vpack.c.bf16 %v162, %v162
      %v165 = vpack.c.bf16 %v163, %v163
      %v166 = vld [vmem:[#allocation3] sm:$0xf]
      %v167 = vld [vmem:[#allocation3 + $0x4] sm:$0xf]
      %v168 = vld [vmem:[#allocation3 + $0x8] sm:$0xf]
      %v169 = vld [vmem:[#allocation3 + $0xc] sm:$0xf]
      %v170 = vld [vmem:[#allocation3 + $0x10] sm:$0xf]
      %v171 = vld [vmem:[#allocation3 + $0x14] sm:$0xf]
      %v172 = vld [vmem:[#allocation3 + $0x18] sm:$0xf]
      %v173 = vld [vmem:[#allocation3 + $0x1c] sm:$0xf]
      %v174 = vld [vmem:[#allocation3 + $0x20] sm:$0xf]
      %v175 = vld [vmem:[#allocation3 + $0x24] sm:$0xf]
      %v176 = vld [vmem:[#allocation3 + $0x28] sm:$0xf]
      %v177 = vld [vmem:[#allocation3 + $0x2c] sm:$0xf]
      %v178 = vld [vmem:[#allocation3 + $0x30] sm:$0xf]
      %v179 = vld [vmem:[#allocation3 + $0x34] sm:$0xf]
      %v180 = vld [vmem:[#allocation3 + $0x38] sm:$0xf]
      %v181 = vld [vmem:[#allocation3 + $0x3c] sm:$0xf]
      %v182 = vld [vmem:[#allocation3 + $0x40] sm:$0xf]
      %v183 = vld [vmem:[#allocation3 + $0x44] sm:$0xf]
      %v184 = vld [vmem:[#allocation3 + $0x48] sm:$0xf]
      %v185 = vld [vmem:[#allocation3 + $0x4c] sm:$0xf]
      %v186 = vld [vmem:[#allocation3 + $0x50] sm:$0xf]
      %v187 = vld [vmem:[#allocation3 + $0x54] sm:$0xf]
      %v188 = vld [vmem:[#allocation3 + $0x58] sm:$0xf]
      %v189 = vld [vmem:[#allocation3 + $0x5c] sm:$0xf]
      %v190 = vld [vmem:[#allocation3 + $0x60] sm:$0xf]
      %v191 = vld [vmem:[#allocation3 + $0x64] sm:$0xf]
      %v192 = vld [vmem:[#allocation3 + $0x68] sm:$0xf]
      %v193 = vld [vmem:[#allocation3 + $0x6c] sm:$0xf]
      %v194 = vld [vmem:[#allocation3 + $0x70] sm:$0xf]
      %v195 = vld [vmem:[#allocation3 + $0x74] sm:$0xf]
      %v196 = vld [vmem:[#allocation3 + $0x78] sm:$0xf]
      %v197 = vld [vmem:[#allocation3 + $0x7c] sm:$0xf]
      %v198 = vld [vmem:[%s4] sm:$0x1]
      %v200 = vlaneseq
      %v201 = vshrl.u32 %v200, 7
      %v202 = vsub.s32 0, %v201
      %v203 = vrot.slane %v198, %v202
      %v237 = vunpack.c.l.b16 %v166
      %v238 = vunpack.c.l.b16 %v167
      %v239 = vunpack.c.l.b16 %v168
      %v240 = vunpack.c.l.b16 %v169
      %v241 = vunpack.c.l.b16 %v170
      %v242 = vunpack.c.l.b16 %v171
      %v243 = vunpack.c.l.b16 %v172
      %v244 = vunpack.c.l.b16 %v173
      %v245 = vunpack.c.l.b16 %v174
      %v246 = vunpack.c.l.b16 %v175
      %v247 = vunpack.c.l.b16 %v176
      %v248 = vunpack.c.l.b16 %v177
      %v249 = vunpack.c.l.b16 %v178
      %v250 = vunpack.c.l.b16 %v179
      %v251 = vunpack.c.l.b16 %v180
      %v252 = vunpack.c.l.b16 %v181
      %v253 = vunpack.c.l.b16 %v182
      %v254 = vunpack.c.l.b16 %v183
      %v255 = vunpack.c.l.b16 %v184
      %v256 = vunpack.c.l.b16 %v185
      %v257 = vunpack.c.l.b16 %v186
      %v258 = vunpack.c.l.b16 %v187
      %v259 = vunpack.c.l.b16 %v188
      %v260 = vunpack.c.l.b16 %v189
      %v261 = vunpack.c.l.b16 %v190
      %v262 = vunpack.c.l.b16 %v191
      %v263 = vunpack.c.l.b16 %v192
      %v264 = vunpack.c.l.b16 %v193
      %v265 = vunpack.c.l.b16 %v194
      %v266 = vunpack.c.l.b16 %v195
      %v267 = vunpack.c.l.b16 %v196
      %v268 = vunpack.c.l.b16 %v197
      %v269 = vpack.c.b16 %v238, %v237
      %v270 = vpack.c.b16 %v240, %v239
      %v271 = vpack.c.b16 %v242, %v241
      %v272 = vpack.c.b16 %v244, %v243
      %v273 = vpack.c.b16 %v246, %v245
      %v274 = vpack.c.b16 %v248, %v247
      %v275 = vpack.c.b16 %v250, %v249
      %v276 = vpack.c.b16 %v252, %v251
      %v277 = vpack.c.b16 %v254, %v253
      %v278 = vpack.c.b16 %v256, %v255
      %v279 = vpack.c.b16 %v258, %v257
      %v280 = vpack.c.b16 %v260, %v259
      %v281 = vpack.c.b16 %v262, %v261
      %v282 = vpack.c.b16 %v264, %v263
      %v283 = vpack.c.b16 %v266, %v265
      %v284 = vpack.c.b16 %v268, %v267
      %301 = vmatprep.subr.bf16.mxu0 0
      %302 = vmatpush1.bf16.msra.mxu0 %v269
      %303 = vmatprep.subr.bf16.mxu0 0
      %304 = vmatpush1.bf16.msra.mxu0 %v270
      %305 = vmatprep.subr.bf16.mxu0 0
      %306 = vmatpush1.bf16.msra.mxu0 %v271
      %307 = vmatprep.subr.bf16.mxu0 0
      %308 = vmatpush1.bf16.msra.mxu0 %v272
      %309 = vmatprep.subr.bf16.mxu0 0
      %310 = vmatpush1.bf16.msra.mxu0 %v273
      %311 = vmatprep.subr.bf16.mxu0 0
      %312 = vmatpush1.bf16.msra.mxu0 %v274
      %313 = vmatprep.subr.bf16.mxu0 0
      %314 = vmatpush1.bf16.msra.mxu0 %v275
      %315 = vmatprep.subr.bf16.mxu0 0
      %316 = vmatpush1.bf16.msra.mxu0 %v276
      %317 = vmatprep.subr.bf16.mxu0 0
      %318 = vmatpush1.bf16.msra.mxu0 %v277
      %319 = vmatprep.subr.bf16.mxu0 0
      %320 = vmatpush1.bf16.msra.mxu0 %v278
      %321 = vmatprep.subr.bf16.mxu0 0
      %322 = vmatpush1.bf16.msra.mxu0 %v279
      %323 = vmatprep.subr.bf16.mxu0 0
      %324 = vmatpush1.bf16.msra.mxu0 %v280
      %325 = vmatprep.subr.bf16.mxu0 0
      %326 = vmatpush1.bf16.msra.mxu0 %v281
      %327 = vmatprep.subr.bf16.mxu0 0
      %328 = vmatpush1.bf16.msra.mxu0 %v282
      %329 = vmatprep.subr.bf16.mxu0 0
      %330 = vmatpush1.bf16.msra.mxu0 %v283
      %331 = vmatprep.subr.bf16.mxu0 0
      %332 = vmatpush1.bf16.msra.mxu0 %v284
      %333 = vmatprep.mubr.bf16.mxu0 %v165
      %334 = vmatmul.mubr.bf16.gmra.mrb[0].mxu0 %v164
      %v335 = vpop.f32.mrb[0].mxu0
      %v336 = vadd.f32 %v203, %v335
      %v337 = vpop.f32.mrb[0].mxu0
      %v338 = vpop.f32.mrb[0].mxu0
      %v339 = vpop.f32.mrb[0].mxu0
      %340 = vdwg.mxu0
      %v341 = vmax.f32 %v336, 0.0
      %v342 = vpack.c.bf16 %v341, %v341
      %v343 = vld [vmem:[%s5] sm:$0xf]
      %v344 = vld [vmem:[%s5 + $0x4] sm:$0xf]
      %v345 = vld [vmem:[%s5 + $0x8] sm:$0xf]
      %v346 = vld [vmem:[%s5 + $0xc] sm:$0xf]
      %v347 = vld [vmem:[%s5 + $0x10] sm:$0xf]
      %v348 = vld [vmem:[%s5 + $0x14] sm:$0xf]
      %v349 = vld [vmem:[%s5 + $0x18] sm:$0xf]
      %v350 = vld [vmem:[%s5 + $0x1c] sm:$0xf]
      %v351 = vld [vmem:[%s5 + $0x20] sm:$0xf]
      %v352 = vld [vmem:[%s5 + $0x24] sm:$0xf]
      %v353 = vld [vmem:[%s5 + $0x28] sm:$0xf]
      %v354 = vld [vmem:[%s5 + $0x2c] sm:$0xf]
      %v355 = vld [vmem:[%s5 + $0x30] sm:$0xf]
      %v356 = vld [vmem:[%s5 + $0x34] sm:$0xf]
      %v357 = vld [vmem:[%s5 + $0x38] sm:$0xf]
      %v358 = vld [vmem:[%s5 + $0x3c] sm:$0xf]
      %v359 = vld [vmem:[%s6] sm:$0x1]
      %v361 = vlaneseq
      %v362 = vshrl.u32 %v361, 7
      %v363 = vsub.s32 0, %v362
      %v364 = vrot.slane %v359, %v363
      %v382 = vunpack.c.l.b16 %v343
      %v383 = vunpack.c.l.b16 %v344
      %v384 = vunpack.c.l.b16 %v345
      %v385 = vunpack.c.l.b16 %v346
      %v386 = vunpack.c.l.b16 %v347
      %v387 = vunpack.c.l.b16 %v348
      %v388 = vunpack.c.l.b16 %v349
      %v389 = vunpack.c.l.b16 %v350
      %v390 = vunpack.c.l.b16 %v351
      %v391 = vunpack.c.l.b16 %v352
      %v392 = vunpack.c.l.b16 %v353
      %v393 = vunpack.c.l.b16 %v354
      %v394 = vunpack.c.l.b16 %v355
      %v395 = vunpack.c.l.b16 %v356
      %v396 = vunpack.c.l.b16 %v357
      %v397 = vunpack.c.l.b16 %v358
      %v398 = vpack.c.b16 %v383, %v382
      %v399 = vpack.c.b16 %v385, %v384
      %v400 = vpack.c.b16 %v387, %v386
      %v401 = vpack.c.b16 %v389, %v388
      %v402 = vpack.c.b16 %v391, %v390
      %v403 = vpack.c.b16 %v393, %v392
      %v404 = vpack.c.b16 %v395, %v394
      %v405 = vpack.c.b16 %v397, %v396
      %414 = vmatprep.subr.bf16.mxu0 0
      %415 = vmatpush1.bf16.msra.mxu0 %v398
      %416 = vmatprep.subr.bf16.mxu0 0
      %417 = vmatpush1.bf16.msra.mxu0 %v399
      %418 = vmatprep.subr.bf16.mxu0 0
      %419 = vmatpush1.bf16.msra.mxu0 %v400
      %420 = vmatprep.subr.bf16.mxu0 0
      %421 = vmatpush1.bf16.msra.mxu0 %v401
      %422 = vmatprep.subr.bf16.mxu0 0
      %423 = vmatpush1.bf16.msra.mxu0 %v402
      %424 = vmatprep.subr.bf16.mxu0 0
      %425 = vmatpush1.bf16.msra.mxu0 %v403
      %426 = vmatprep.subr.bf16.mxu0 0
      %427 = vmatpush1.bf16.msra.mxu0 %v404
      %428 = vmatprep.subr.bf16.mxu0 0
      %429 = vmatpush1.bf16.msra.mxu0 %v405
      %430 = vmatprep.subr.bf16.mxu0 0
      %431 = vmatpush1.bf16.msra.mxu0 0
      %432 = vmatprep.subr.bf16.mxu0 0
      %433 = vmatpush1.bf16.msra.mxu0 0
      %434 = vmatprep.subr.bf16.mxu0 0
      %435 = vmatpush1.bf16.msra.mxu0 0
      %436 = vmatprep.subr.bf16.mxu0 0
      %437 = vmatpush1.bf16.msra.mxu0 0
      %438 = vmatprep.subr.bf16.mxu0 0
      %439 = vmatpush1.bf16.msra.mxu0 0
      %440 = vmatprep.subr.bf16.mxu0 0
      %441 = vmatpush1.bf16.msra.mxu0 0
      %442 = vmatprep.subr.bf16.mxu0 0
      %443 = vmatpush1.bf16.msra.mxu0 0
      %444 = vmatprep.subr.bf16.mxu0 0
      %445 = vmatpush1.bf16.msra.mxu0 0
      %446 = vmatprep.mubr.bf16.mxu0 0
      %447 = vmatmul.mubr.bf16.gmra.mrb[0].mxu0 %v342
      %v448 = vpop.f32.mrb[0].mxu0
      %v449 = vadd.f32 %v364, %v448
      %v450 = vpop.f32.mrb[0].mxu0
      %v451 = vpop.f32.mrb[0].mxu0
      %v452 = vpop.f32.mrb[0].mxu0
      %453 = vdwg.mxu0
      %vm454 = vcmask 17408
      %455 = vst.msk [vmem:[#allocation6] sm:$0x3] %vm454, %v449
    $region41: #{tpu_custom_call.1} parent=1 // pred_fallthru
      _
    // Predicated region
    $region42: #{tpu_custom_call.1} parent=1 // pred_check
      _
    $region43: #{tpu_custom_call.1} parent=1 // pred_check_branch
      %457 = sbr.rel (0) target = $region45
    $region44: #{tpu_custom_call.1} parent=1 // pred_region
      %s459 = ssub.s32 32, 32
      %460 = vsyncadd [#allocation5], %s459
      %s462 = sshll.u32 [#allocation6], 4
      %s463 = int_to_ptr.vmem [resolvable:$true] %s462
      %465 = dma.vmem_to_hbm [thread:$0]  %s463, 32, %s7, [#allocation5]
    $region45: #{tpu_custom_call.1} parent=1 // pred_fallthru
      _
    // Predicated region
    $region46: #{tpu_custom_call.1} parent=1 // pred_check
      _
    $region47: #{tpu_custom_call.1} parent=1 // pred_check_branch
      %467 = sbr.rel (0) target = $region49
    $region48: #{tpu_custom_call.1} parent=1 // pred_region
      %468 = dma.done [#allocation5], 32
    $region49: #{tpu_custom_call.1} parent=1 // pred_fallthru
      _
    %469 = vsyncpa [#allocation4], 1
    %470 = vsyncpa [#allocation5], 1

// kernel: tpu_custom_call.1
$region0: #{tpu_custom_call.1}
  #allocation0 [shape = 'u32[]', space=smem, size = 0x4, offset = 0x4, fixed_abs, tag = 'smem constant byte address 0x4 - core index']
  #allocation1 [shape = 'u32[144,128]{1,0:T(1,128)}', space=vmem, size = 0x12000, scoped, tag = 'internal scratch']
  #allocation2 [shape = 'f32[2,32]{1,0:T(2,128)}', space=vmem, size = 0x400, scoped, tag = 'scratch operand']
  %s0 = inlined_call_operand.vmem [shape: bf16[2,8,32], index: 0, kind: input, shape index: {}]
  %s1 = inlined_call_operand.vmem [shape: bf16[32,256], index: 1, kind: input, shape index: {}]
  %s2 = inlined_call_operand.vmem [shape: f32[1,256], index: 2, kind: input, shape index: {}]
  %s3 = inlined_call_operand.hbm [shape: bf16[256,128], index: 3, kind: input, shape index: {}]
  %s4 = inlined_call_operand.vmem [shape: f32[1,128], index: 4, kind: input, shape index: {}]
  %s5 = inlined_call_operand.vmem [shape: bf16[128,3], index: 5, kind: input, shape index: {}]
  %s6 = inlined_call_operand.vmem [shape: f32[1,3], index: 6, kind: input, shape index: {}]
  %s7 = inlined_call_operand.hbm [shape: f32[2,3], index: 7, kind: output, shape index: {}]
  %s8 = sld [smem:[#allocation0]]
  $region50: #{tpu_custom_call.1} parent=0
    _
  %s10 = ssub.s32 1, %s8
  %s11 = scalar_select 0, %s10, %s8
  $region1: #{tpu_custom_call.1} parent=0
    #allocation3 [shape = 'u8[65536]{0}', space=vmem, size = 0x10000, scoped, tag = 'input window, operand 3, single buffered']
    #allocation4 [shape = 's32[1]{0}', space=sflag, size = 0x4, scoped, tag = 'scoped memory for tpu_custom_call.1']
    #allocation5 [shape = 's32[1]{0}', space=sflag, size = 0x4, scoped, tag = 'scoped memory for tpu_custom_call.1']
    #allocation6 [shape = 'u8[1024]{0}', space=vmem, size = 0x400, scoped, tag = 'output window, operand 0, single buffered']
    %12 = vsyncpa [#allocation4], 0
    %13 = vsyncpa [#allocation5], 0
    // Predicated region
    $region2: #{tpu_custom_call.1} parent=1 // pred_check
      _
    $region3: #{tpu_custom_call.1} parent=1 // pred_check_branch
      %15 = sbr.rel (0) target = $region5
    $region4: #{tpu_custom_call.1} parent=1 // pred_region
      _
    $region5: #{tpu_custom_call.1} parent=1 // pred_fallthru
      _
    // Predicated region
    $region6: #{tpu_custom_call.1} parent=1 // pred_check
      _
    $region7: #{tpu_custom_call.1} parent=1 // pred_check_branch
      %17 = sbr.rel (0) target = $region9
    $region8: #{tpu_custom_call.1} parent=1 // pred_region
      _
    $region9: #{tpu_custom_call.1} parent=1 // pred_fallthru
      _
    // Predicated region
    $region10: #{tpu_custom_call.1} parent=1 // pred_check
      _
    $region11: #{tpu_custom_call.1} parent=1 // pred_check_branch
      %19 = sbr.rel (0) target = $region13
    $region12: #{tpu_custom_call.1} parent=1 // pred_region
      _
    $region13: #{tpu_custom_call.1} parent=1 // pred_fallthru
      _
    // Predicated region
    $region14: #{tpu_custom_call.1} parent=1 // pred_check
      _
    $region15: #{tpu_custom_call.1} parent=1 // pred_check_branch
      %21 = sbr.rel (0) target = $region17
    $region16: #{tpu_custom_call.1} parent=1 // pred_region
      %s23 = ssub.s32 2048, 2048
      %24 = vsyncadd [#allocation4], %s23
      %s25 = sshll.u32 [#allocation3], 4
      %s26 = int_to_ptr.vmem [resolvable:$true] %s25
      %31 = dma.hbm_to_vmem [thread:$0]  %s3, 2048, %s26, [#allocation4], 64, 64, 4
    $region17: #{tpu_custom_call.1} parent=1 // pred_fallthru
      _
    // Predicated region
    $region18: #{tpu_custom_call.1} parent=1 // pred_check
      _
    $region19: #{tpu_custom_call.1} parent=1 // pred_check_branch
      %33 = sbr.rel (0) target = $region21
    $region20: #{tpu_custom_call.1} parent=1 // pred_region
      _
    $region21: #{tpu_custom_call.1} parent=1 // pred_fallthru
      _
    // Predicated region
    $region22: #{tpu_custom_call.1} parent=1 // pred_check
      _
    $region23: #{tpu_custom_call.1} parent=1 // pred_check_branch
      %35 = sbr.rel (0) target = $region25
    $region24: #{tpu_custom_call.1} parent=1 // pred_region
      _
    $region25: #{tpu_custom_call.1} parent=1 // pred_fallthru
      _
    // Predicated region
    $region26: #{tpu_custom_call.1} parent=1 // pred_check
      _
    $region27: #{tpu_custom_call.1} parent=1 // pred_check_branch
      %37 = sbr.rel (0) target = $region29
    $region28: #{tpu_custom_call.1} parent=1 // pred_region
      _
    $region29: #{tpu_custom_call.1} parent=1 // pred_fallthru
      _
    // Predicated region
    $region30: #{tpu_custom_call.1} parent=1 // pred_check
      _
    $region31: #{tpu_custom_call.1} parent=1 // pred_check_branch
      %39 = sbr.rel (0) target = $region33
    $region32: #{tpu_custom_call.1} parent=1 // pred_region
      %40 = dma.done [#allocation4], 2048
    $region33: #{tpu_custom_call.1} parent=1 // pred_fallthru
      _
    %p42 = scmp.eq.s32.totalorder 0, 0
    // Predicated region
    $region34: #{tpu_custom_call.1} parent=1 // pred_check
      %p43 = pneg %p42
    $region35: #{tpu_custom_call.1} parent=1 // pred_check_branch
      %45 = sbr.rel (%p43) target = $region37
    $region36: #{tpu_custom_call.1} parent=1 // pred_region
      %vm46 = vcmask 254976
      %47 = vst.msk [vmem:[#allocation2] sm:$0x3] %vm46, 0.0
    $region37: #{tpu_custom_call.1} parent=1 // pred_fallthru
      _
    %v48 = vld [vmem:[#allocation2] sm:$0x3]
    %v49 = vld [vmem:[%s0] sm:$0xf]
    %v50 = vld [vmem:[%s0 + $0x4] sm:$0xf]
    %v51 = vunpack.c.l.bf16 %v49
    %v52 = vunpack.c.l.bf16 %v50
    %vm53 = vcmask 261120
    %v54 = vsel %vm53, %v51, 0.0
    %v55 = vrot.slane %v54, 4
    %v56 = vadd.f32 %v54, %v55
    %v57 = vrot.slane %v56, 2
    %v58 = vadd.f32 %v56, %v57
    %v59 = vrot.slane %v58, 1
    %v60 = vadd.f32 %v58, %v59
    %v61 = vsel %vm53, %v52, 0.0
    %v62 = vrot.slane %v61, 4
    %v63 = vadd.f32 %v61, %v62
    %v64 = vrot.slane %v63, 2
    %v65 = vadd.f32 %v63, %v64
    %v66 = vrot.slane %v65, 1
    %v67 = vadd.f32 %v65, %v66
    %vm70 = vcmask 1041409
    %v71 = vsel %vm70, %v67, %v60
    %v73 = vadd.f32 %v48, %v71
    %vm74 = vcmask 254976
    %75 = vst.msk [vmem:[#allocation2] sm:$0x3] %vm74, %v73
    // Predicated region
    $region38: #{tpu_custom_call.1} parent=1 // pred_check
      %p76 = pneg %p42
    $region39: #{tpu_custom_call.1} parent=1 // pred_check_branch
      %78 = sbr.rel (%p76) target = $region41
    $region40: #{tpu_custom_call.1} parent=1 // pred_region
      %v79 = vld [vmem:[#allocation2] sm:$0x3]
      %v80 = vmul.f32 %v79, 0.125
      %v81 = vpack.c.bf16 %v80, %v80
      %v82 = vld [vmem:[%s1] sm:$0xff]
      %v83 = vld [vmem:[%s1 + $0x8] sm:$0xff]
      %v84 = vld [vmem:[%s1 + $0x10] sm:$0xff]
      %v85 = vld [vmem:[%s1 + $0x18] sm:$0xff]
      %v86 = vld [vmem:[%s2] sm:$0x3]
      %v88 = vlaneseq
      %v89 = vshrl.u32 %v88, 7
      %v90 = vsub.s32 0, %v89
      %v91 = vrot.slane %v86, %v90
      %v92 = vlaneseq
      %v93 = vshrl.u32 %v92, 7
      %v94 = vsub.s32 1, %v93
      %v95 = vrot.slane %v86, %v94
      %v102 = vunpack.c.l.b16 %v82
      %v103 = vunpack.c.h.b16 %v82
      %v104 = vunpack.c.l.b16 %v83
      %v105 = vunpack.c.h.b16 %v83
      %v106 = vunpack.c.l.b16 %v84
      %v107 = vunpack.c.h.b16 %v84
      %v108 = vunpack.c.l.b16 %v85
      %v109 = vunpack.c.h.b16 %v85
      %v110 = vpack.c.b16 %v104, %v102
      %v111 = vpack.c.b16 %v105, %v103
      %v112 = vpack.c.b16 %v108, %v106
      %v113 = vpack.c.b16 %v109, %v107
      %v119 = vsel %vm53, %v81, 0
      %121 = vmatprep.subr.bf16.mxu0 %v111
      %122 = vmatpush1.bf16.msra.mxu0 %v110
      %123 = vmatprep.subr.bf16.mxu0 %v113
      %124 = vmatpush1.bf16.msra.mxu0 %v112
      %125 = vmatprep.subr.bf16.mxu0 0
      %126 = vmatpush1.bf16.msra.mxu0 0
      %127 = vmatprep.subr.bf16.mxu0 0
      %128 = vmatpush1.bf16.msra.mxu0 0
      %129 = vmatprep.subr.bf16.mxu0 0
      %130 = vmatpush1.bf16.msra.mxu0 0
      %131 = vmatprep.subr.bf16.mxu0 0
      %132 = vmatpush1.bf16.msra.mxu0 0
      %133 = vmatprep.subr.bf16.mxu0 0
      %134 = vmatpush1.bf16.msra.mxu0 0
      %135 = vmatprep.subr.bf16.mxu0 0
      %136 = vmatpush1.bf16.msra.mxu0 0
      %137 = vmatprep.subr.bf16.mxu0 0
      %138 = vmatpush1.bf16.msra.mxu0 0
      %139 = vmatprep.subr.bf16.mxu0 0
      %140 = vmatpush1.bf16.msra.mxu0 0
      %141 = vmatprep.subr.bf16.mxu0 0
      %142 = vmatpush1.bf16.msra.mxu0 0
      %143 = vmatprep.subr.bf16.mxu0 0
      %144 = vmatpush1.bf16.msra.mxu0 0
      %145 = vmatprep.subr.bf16.mxu0 0
      %146 = vmatpush1.bf16.msra.mxu0 0
      %147 = vmatprep.subr.bf16.mxu0 0
      %148 = vmatpush1.bf16.msra.mxu0 0
      %149 = vmatprep.subr.bf16.mxu0 0
      %150 = vmatpush1.bf16.msra.mxu0 0
      %151 = vmatprep.subr.bf16.mxu0 0
      %152 = vmatpush1.bf16.msra.mxu0 0
      %153 = vmatprep.mubr.bf16.mxu0 0
      %154 = vmatmul.mubr.bf16.gmra.mrb[0].mxu0 %v119
      %v155 = vpop.f32.mrb[0].mxu0
      %v156 = vadd.f32 %v91, %v155
      %v157 = vpop.f32.mrb[0].mxu0
      %v158 = vadd.f32 %v95, %v157
      %v159 = vpop.f32.mrb[0].mxu0
      %v160 = vpop.f32.mrb[0].mxu0
      %161 = vdwg.mxu0
      %v162 = vmax.f32 %v156, 0.0
      %v163 = vmax.f32 %v158, 0.0
      %v164 = vpack.c.bf16 %v162, %v162
      %v165 = vpack.c.bf16 %v163, %v163
      %v166 = vld [vmem:[#allocation3] sm:$0xf]
      %v167 = vld [vmem:[#allocation3 + $0x4] sm:$0xf]
      %v168 = vld [vmem:[#allocation3 + $0x8] sm:$0xf]
      %v169 = vld [vmem:[#allocation3 + $0xc] sm:$0xf]
      %v170 = vld [vmem:[#allocation3 + $0x10] sm:$0xf]
      %v171 = vld [vmem:[#allocation3 + $0x14] sm:$0xf]
      %v172 = vld [vmem:[#allocation3 + $0x18] sm:$0xf]
      %v173 = vld [vmem:[#allocation3 + $0x1c] sm:$0xf]
      %v174 = vld [vmem:[#allocation3 + $0x20] sm:$0xf]
      %v175 = vld [vmem:[#allocation3 + $0x24] sm:$0xf]
      %v176 = vld [vmem:[#allocation3 + $0x28] sm:$0xf]
      %v177 = vld [vmem:[#allocation3 + $0x2c] sm:$0xf]
      %v178 = vld [vmem:[#allocation3 + $0x30] sm:$0xf]
      %v179 = vld [vmem:[#allocation3 + $0x34] sm:$0xf]
      %v180 = vld [vmem:[#allocation3 + $0x38] sm:$0xf]
      %v181 = vld [vmem:[#allocation3 + $0x3c] sm:$0xf]
      %v182 = vld [vmem:[#allocation3 + $0x40] sm:$0xf]
      %v183 = vld [vmem:[#allocation3 + $0x44] sm:$0xf]
      %v184 = vld [vmem:[#allocation3 + $0x48] sm:$0xf]
      %v185 = vld [vmem:[#allocation3 + $0x4c] sm:$0xf]
      %v186 = vld [vmem:[#allocation3 + $0x50] sm:$0xf]
      %v187 = vld [vmem:[#allocation3 + $0x54] sm:$0xf]
      %v188 = vld [vmem:[#allocation3 + $0x58] sm:$0xf]
      %v189 = vld [vmem:[#allocation3 + $0x5c] sm:$0xf]
      %v190 = vld [vmem:[#allocation3 + $0x60] sm:$0xf]
      %v191 = vld [vmem:[#allocation3 + $0x64] sm:$0xf]
      %v192 = vld [vmem:[#allocation3 + $0x68] sm:$0xf]
      %v193 = vld [vmem:[#allocation3 + $0x6c] sm:$0xf]
      %v194 = vld [vmem:[#allocation3 + $0x70] sm:$0xf]
      %v195 = vld [vmem:[#allocation3 + $0x74] sm:$0xf]
      %v196 = vld [vmem:[#allocation3 + $0x78] sm:$0xf]
      %v197 = vld [vmem:[#allocation3 + $0x7c] sm:$0xf]
      %v198 = vld [vmem:[%s4] sm:$0x1]
      %v200 = vlaneseq
      %v201 = vshrl.u32 %v200, 7
      %v202 = vsub.s32 0, %v201
      %v203 = vrot.slane %v198, %v202
      %v237 = vunpack.c.l.b16 %v166
      %v238 = vunpack.c.l.b16 %v167
      %v239 = vunpack.c.l.b16 %v168
      %v240 = vunpack.c.l.b16 %v169
      %v241 = vunpack.c.l.b16 %v170
      %v242 = vunpack.c.l.b16 %v171
      %v243 = vunpack.c.l.b16 %v172
      %v244 = vunpack.c.l.b16 %v173
      %v245 = vunpack.c.l.b16 %v174
      %v246 = vunpack.c.l.b16 %v175
      %v247 = vunpack.c.l.b16 %v176
      %v248 = vunpack.c.l.b16 %v177
      %v249 = vunpack.c.l.b16 %v178
      %v250 = vunpack.c.l.b16 %v179
      %v251 = vunpack.c.l.b16 %v180
      %v252 = vunpack.c.l.b16 %v181
      %v253 = vunpack.c.l.b16 %v182
      %v254 = vunpack.c.l.b16 %v183
      %v255 = vunpack.c.l.b16 %v184
      %v256 = vunpack.c.l.b16 %v185
      %v257 = vunpack.c.l.b16 %v186
      %v258 = vunpack.c.l.b16 %v187
      %v259 = vunpack.c.l.b16 %v188
      %v260 = vunpack.c.l.b16 %v189
      %v261 = vunpack.c.l.b16 %v190
      %v262 = vunpack.c.l.b16 %v191
      %v263 = vunpack.c.l.b16 %v192
      %v264 = vunpack.c.l.b16 %v193
      %v265 = vunpack.c.l.b16 %v194
      %v266 = vunpack.c.l.b16 %v195
      %v267 = vunpack.c.l.b16 %v196
      %v268 = vunpack.c.l.b16 %v197
      %v269 = vpack.c.b16 %v238, %v237
      %v270 = vpack.c.b16 %v240, %v239
      %v271 = vpack.c.b16 %v242, %v241
      %v272 = vpack.c.b16 %v244, %v243
      %v273 = vpack.c.b16 %v246, %v245
      %v274 = vpack.c.b16 %v248, %v247
      %v275 = vpack.c.b16 %v250, %v249
      %v276 = vpack.c.b16 %v252, %v251
      %v277 = vpack.c.b16 %v254, %v253
      %v278 = vpack.c.b16 %v256, %v255
      %v279 = vpack.c.b16 %v258, %v257
      %v280 = vpack.c.b16 %v260, %v259
      %v281 = vpack.c.b16 %v262, %v261
      %v282 = vpack.c.b16 %v264, %v263
      %v283 = vpack.c.b16 %v266, %v265
      %v284 = vpack.c.b16 %v268, %v267
      %301 = vmatprep.subr.bf16.mxu0 0
      %302 = vmatpush1.bf16.msra.mxu0 %v269
      %303 = vmatprep.subr.bf16.mxu0 0
      %304 = vmatpush1.bf16.msra.mxu0 %v270
      %305 = vmatprep.subr.bf16.mxu0 0
      %306 = vmatpush1.bf16.msra.mxu0 %v271
      %307 = vmatprep.subr.bf16.mxu0 0
      %308 = vmatpush1.bf16.msra.mxu0 %v272
      %309 = vmatprep.subr.bf16.mxu0 0
      %310 = vmatpush1.bf16.msra.mxu0 %v273
      %311 = vmatprep.subr.bf16.mxu0 0
      %312 = vmatpush1.bf16.msra.mxu0 %v274
      %313 = vmatprep.subr.bf16.mxu0 0
      %314 = vmatpush1.bf16.msra.mxu0 %v275
      %315 = vmatprep.subr.bf16.mxu0 0
      %316 = vmatpush1.bf16.msra.mxu0 %v276
      %317 = vmatprep.subr.bf16.mxu0 0
      %318 = vmatpush1.bf16.msra.mxu0 %v277
      %319 = vmatprep.subr.bf16.mxu0 0
      %320 = vmatpush1.bf16.msra.mxu0 %v278
      %321 = vmatprep.subr.bf16.mxu0 0
      %322 = vmatpush1.bf16.msra.mxu0 %v279
      %323 = vmatprep.subr.bf16.mxu0 0
      %324 = vmatpush1.bf16.msra.mxu0 %v280
      %325 = vmatprep.subr.bf16.mxu0 0
      %326 = vmatpush1.bf16.msra.mxu0 %v281
      %327 = vmatprep.subr.bf16.mxu0 0
      %328 = vmatpush1.bf16.msra.mxu0 %v282
      %329 = vmatprep.subr.bf16.mxu0 0
      %330 = vmatpush1.bf16.msra.mxu0 %v283
      %331 = vmatprep.subr.bf16.mxu0 0
      %332 = vmatpush1.bf16.msra.mxu0 %v284
      %333 = vmatprep.mubr.bf16.mxu0 %v165
      %334 = vmatmul.mubr.bf16.gmra.mrb[0].mxu0 %v164
      %v335 = vpop.f32.mrb[0].mxu0
      %v336 = vadd.f32 %v203, %v335
      %v337 = vpop.f32.mrb[0].mxu0
      %v338 = vpop.f32.mrb[0].mxu0
      %v339 = vpop.f32.mrb[0].mxu0
      %340 = vdwg.mxu0
      %v341 = vmax.f32 %v336, 0.0
      %v342 = vpack.c.bf16 %v341, %v341
      %v343 = vld [vmem:[%s5] sm:$0xf]
      %v344 = vld [vmem:[%s5 + $0x4] sm:$0xf]
      %v345 = vld [vmem:[%s5 + $0x8] sm:$0xf]
      %v346 = vld [vmem:[%s5 + $0xc] sm:$0xf]
      %v347 = vld [vmem:[%s5 + $0x10] sm:$0xf]
      %v348 = vld [vmem:[%s5 + $0x14] sm:$0xf]
      %v349 = vld [vmem:[%s5 + $0x18] sm:$0xf]
      %v350 = vld [vmem:[%s5 + $0x1c] sm:$0xf]
      %v351 = vld [vmem:[%s5 + $0x20] sm:$0xf]
      %v352 = vld [vmem:[%s5 + $0x24] sm:$0xf]
      %v353 = vld [vmem:[%s5 + $0x28] sm:$0xf]
      %v354 = vld [vmem:[%s5 + $0x2c] sm:$0xf]
      %v355 = vld [vmem:[%s5 + $0x30] sm:$0xf]
      %v356 = vld [vmem:[%s5 + $0x34] sm:$0xf]
      %v357 = vld [vmem:[%s5 + $0x38] sm:$0xf]
      %v358 = vld [vmem:[%s5 + $0x3c] sm:$0xf]
      %v359 = vld [vmem:[%s6] sm:$0x1]
      %v361 = vlaneseq
      %v362 = vshrl.u32 %v361, 7
      %v363 = vsub.s32 0, %v362
      %v364 = vrot.slane %v359, %v363
      %v382 = vunpack.c.l.b16 %v343
      %v383 = vunpack.c.l.b16 %v344
      %v384 = vunpack.c.l.b16 %v345
      %v385 = vunpack.c.l.b16 %v346
      %v386 = vunpack.c.l.b16 %v347
      %v387 = vunpack.c.l.b16 %v348
      %v388 = vunpack.c.l.b16 %v349
      %v389 = vunpack.c.l.b16 %v350
      %v390 = vunpack.c.l.b16 %v351
      %v391 = vunpack.c.l.b16 %v352
      %v392 = vunpack.c.l.b16 %v353
      %v393 = vunpack.c.l.b16 %v354
      %v394 = vunpack.c.l.b16 %v355
      %v395 = vunpack.c.l.b16 %v356
      %v396 = vunpack.c.l.b16 %v357
      %v397 = vunpack.c.l.b16 %v358
      %v398 = vpack.c.b16 %v383, %v382
      %v399 = vpack.c.b16 %v385, %v384
      %v400 = vpack.c.b16 %v387, %v386
      %v401 = vpack.c.b16 %v389, %v388
      %v402 = vpack.c.b16 %v391, %v390
      %v403 = vpack.c.b16 %v393, %v392
      %v404 = vpack.c.b16 %v395, %v394
      %v405 = vpack.c.b16 %v397, %v396
      %414 = vmatprep.subr.bf16.mxu0 0
      %415 = vmatpush1.bf16.msra.mxu0 %v398
      %416 = vmatprep.subr.bf16.mxu0 0
      %417 = vmatpush1.bf16.msra.mxu0 %v399
      %418 = vmatprep.subr.bf16.mxu0 0
      %419 = vmatpush1.bf16.msra.mxu0 %v400
      %420 = vmatprep.subr.bf16.mxu0 0
      %421 = vmatpush1.bf16.msra.mxu0 %v401
      %422 = vmatprep.subr.bf16.mxu0 0
      %423 = vmatpush1.bf16.msra.mxu0 %v402
      %424 = vmatprep.subr.bf16.mxu0 0
      %425 = vmatpush1.bf16.msra.mxu0 %v403
      %426 = vmatprep.subr.bf16.mxu0 0
      %427 = vmatpush1.bf16.msra.mxu0 %v404
      %428 = vmatprep.subr.bf16.mxu0 0
      %429 = vmatpush1.bf16.msra.mxu0 %v405
      %430 = vmatprep.subr.bf16.mxu0 0
      %431 = vmatpush1.bf16.msra.mxu0 0
      %432 = vmatprep.subr.bf16.mxu0 0
      %433 = vmatpush1.bf16.msra.mxu0 0
      %434 = vmatprep.subr.bf16.mxu0 0
      %435 = vmatpush1.bf16.msra.mxu0 0
      %436 = vmatprep.subr.bf16.mxu0 0
      %437 = vmatpush1.bf16.msra.mxu0 0
      %438 = vmatprep.subr.bf16.mxu0 0
      %439 = vmatpush1.bf16.msra.mxu0 0
      %440 = vmatprep.subr.bf16.mxu0 0
      %441 = vmatpush1.bf16.msra.mxu0 0
      %442 = vmatprep.subr.bf16.mxu0 0
      %443 = vmatpush1.bf16.msra.mxu0 0
      %444 = vmatprep.subr.bf16.mxu0 0
      %445 = vmatpush1.bf16.msra.mxu0 0
      %446 = vmatprep.mubr.bf16.mxu0 0
      %447 = vmatmul.mubr.bf16.gmra.mrb[0].mxu0 %v342
      %v448 = vpop.f32.mrb[0].mxu0
      %v449 = vadd.f32 %v364, %v448
      %v450 = vpop.f32.mrb[0].mxu0
      %v451 = vpop.f32.mrb[0].mxu0
      %v452 = vpop.f32.mrb[0].mxu0
      %453 = vdwg.mxu0
      %vm454 = vcmask 17408
      %455 = vst.msk [vmem:[#allocation6] sm:$0x3] %vm454, %v449
    $region41: #{tpu_custom_call.1} parent=1 // pred_fallthru
      _
    // Predicated region
    $region42: #{tpu_custom_call.1} parent=1 // pred_check
      _
    $region43: #{tpu_custom_call.1} parent=1 // pred_check_branch
      %457 = sbr.rel (0) target = $region45
    $region44: #{tpu_custom_call.1} parent=1 // pred_region
      %s459 = ssub.s32 32, 32
      %460 = vsyncadd [#allocation5], %s459
      %s462 = sshll.u32 [#allocation6], 4
      %s463 = int_to_ptr.vmem [resolvable:$true] %s462
      %465 = dma.vmem_to_hbm [thread:$0]  %s463, 32, %s7, [#allocation5]
    $region45: #{tpu_custom_call.1} parent=1 // pred_fallthru
      _
    // Predicated region
    $region46: #{tpu_custom_call.1} parent=1 // pred_check
      _
    $region47: #{tpu_custom_call.1} parent=1 // pred_check_branch
      %467 = sbr.rel (0) target = $region49
    $region48: #{tpu_custom_call.1} parent=1 // pred_region
      %468 = dma.done [#allocation5], 32
    $region49: #{tpu_custom_call.1} parent=1 // pred_fallthru
      _
    %469 = vsyncpa [#allocation4], 1
    %470 = vsyncpa [#allocation5], 1

</llo_original>
